<compile_context>
chip_gen: v6e
topology: v6e:2x2x1
jax: 0.10.0
libtpu: 0.0.40
codegen_flags: <defaults>
</compile_context>

<pallas_src>
import jax
import jax.numpy as jnp
from jax.experimental import pallas as pl
from jax.experimental.pallas import tpu as pltpu


def _wnconv2d_kernel(patches_ref, w_ref, b_ref, o_ref):
    # patches_ref: (CK, TM)      lane-dense im2col tile (TM is a multiple of 128)
    # w_ref      : (C_out, CK)   weight-normalized weights (resident)
    # b_ref      : (C_out, 1)    conv bias (resident)
    # o_ref      : (C_out, TM)   lane-dense output tile
    acc = jnp.dot(w_ref[...], patches_ref[...],
                  preferred_element_type=jnp.float32)      # MXU, (C_out, TM)
    o_ref[...] = (acc + b_ref[...]).astype(o_ref.dtype)    # unmasked lane-dense store


def _pair(v):
    return (v, v) if isinstance(v, int) else tuple(v)


def wnconv2d_forward(x, v, g, bias, *, stride=1, padding=1, tile_m=1024):
    """Weight-normalized Conv2d forward, NCHW -> NCHW (torch.nn.Conv2d semantics).

    x   : (N, C_in, H, W)
    v   : (C_out, C_in, KH, KW)   weight_norm direction ("v")
    g   : (C_out,)                weight_norm magnitude ("g")
    bias: (C_out,)
    """
    N, C_in, H, W = x.shape
    C_out, _, KH, KW = v.shape
    sh, sw = _pair(stride)
    ph, pw = _pair(padding)
    H_out = (H + 2 * ph - KH) // sh + 1
    W_out = (W + 2 * pw - KW) // sw + 1

    CK = C_in * KH * KW
    M = N * H_out * W_out

    # ---- weight norm (hoisted: one-time, tiny O(C_out*CK) work) ----
    v_flat = v.reshape(C_out, CK)
    inv_norm = jax.lax.rsqrt(jnp.sum(v_flat * v_flat, axis=1, keepdims=True))  # (C_out, 1)
    w_flat = v_flat * (g.reshape(C_out, 1) * inv_norm)                          # (C_out, CK)
    b2 = bias.reshape(C_out, 1)

    # ---- im2col glue, built directly in the lane-dense (CK, M) orientation ----
    x_pad = jnp.pad(x, ((0, 0), (0, 0), (ph, ph), (pw, pw)))
    cols = []
    for kh in range(KH):
        for kw in range(KW):
            # (N, C_in, H_out, W_out): x_pad[n, c, ho*sh + kh, wo*sw + kw]
            cols.append(x_pad[:, :, kh: kh + H_out * sh: sh, kw: kw + W_out * sw: sw])
    patches = jnp.stack(cols, axis=0)                       # (KH*KW, N, C_in, H_out, W_out)
    patches = patches.transpose(2, 0, 1, 3, 4)              # (C_in, KH*KW, N, H_out, W_out)
    patches = patches.reshape(CK, M)                        # CK order: (ci, kh, kw) == weight order

    # ---- tile the M (lane) axis ----
    m_aligned = pl.cdiv(M, 128) * 128
    TM = min(pl.cdiv(tile_m, 128) * 128, m_aligned)
    M_pad = pl.cdiv(M, TM) * TM
    if M_pad != M:
        patches = jnp.pad(patches, ((0, 0), (0, M_pad - M)))
    grid_m = M_pad // TM

    elt = jnp.dtype(x.dtype).itemsize
    cost = pl.CostEstimate(
        flops=2 * M_pad * CK * C_out,
        transcendentals=0,
        bytes_accessed=(CK * M_pad + C_out * CK + C_out + C_out * M_pad) * elt,
    )

    out_flat = pl.pallas_call(
        _wnconv2d_kernel,
        out_shape=jax.ShapeDtypeStruct((C_out, M_pad), x.dtype),
        grid=(grid_m,),
        in_specs=[
            pl.BlockSpec((CK, TM), lambda i: (0, i),
                         memory_space=pltpu.MemorySpace.VMEM),      # streamed, double-buffered
            pl.BlockSpec((C_out, CK), lambda i: (0, 0),
                         memory_space=pltpu.MemorySpace.VMEM),      # resident
            pl.BlockSpec((C_out, 1), lambda i: (0, 0),
                         memory_space=pltpu.MemorySpace.VMEM),      # resident
        ],
        out_specs=pl.BlockSpec((C_out, TM), lambda i: (0, i),
                               memory_space=pltpu.MemorySpace.VMEM),
        compiler_params=pltpu.CompilerParams(
            dimension_semantics=("parallel",),          # M-grid sharded across TCs (v7x)
            allow_input_fusion=[True, False, False],    # let XLA fuse im2col into the input DMA
        ),
        cost_estimate=cost,
    )(patches, w_flat, b2)

    # (C_out, M) -> (N, C_out, H_out, W_out)
    out = out_flat[:, :M].reshape(C_out, N, H_out, W_out)
    return out.transpose(1, 0, 2, 3)


if __name__ == "__main__":
    # WNConv2D(in_channels=4, out_channels=8, kernel_size=3, stride=1, padding=1)
    N, C_in, H, W = 2, 4, 16, 16
    C_out, KH, KW = 8, 3, 3
    stride, padding = 1, 1

    key = jax.random.PRNGKey(0)
    kx, kv, kg, kb = jax.random.split(key, 4)
    x = jax.random.normal(kx, (N, C_in, H, W), dtype=jnp.float32)
    v = jax.random.normal(kv, (C_out, C_in, KH, KW), dtype=jnp.float32)
    g = jax.random.normal(kg, (C_out,), dtype=jnp.float32)
    bias = jax.random.normal(kb, (C_out,), dtype=jnp.float32)

    # tile_m=256 so the small demo actually exercises a multi-step (2-step) grid.
    out = wnconv2d_forward(x, v, g, bias, stride=stride, padding=padding, tile_m=256)
    out = jax.block_until_ready(out)

    # Reference: weight-normalized conv2d via lax.conv, NCHW layout.
    norm = jnp.sqrt(jnp.sum(v * v, axis=(1, 2, 3), keepdims=True))      # (C_out,1,1,1)
    w_full = v * (g.reshape(C_out, 1, 1, 1) / norm)
    ref = jax.lax.conv_general_dilated(
        x, w_full, window_strides=(stride, stride),
        padding=[(padding, padding), (padding, padding)],
        dimension_numbers=("NCHW", "OIHW", "NCHW"),
    ) + bias.reshape(1, C_out, 1, 1)

    assert out.shape == (N, C_out, H, W), out.shape
    assert jnp.allclose(out, ref, atol=1e-4, rtol=1e-4)
    print("KERNEL_OK")
</pallas_src>

<mosaic_0001>
module attributes {stable_mosaic.version = 11 : i64} {
  func.func @_wnconv2d_kernel(%arg0: i32, %arg1: memref<36x256xf32, #tpu.memory_space<vmem>>, %arg2: memref<8x36xf32, #tpu.memory_space<vmem>>, %arg3: memref<8x1xf32, #tpu.memory_space<vmem>>, %arg4: memref<8x256xf32, #tpu.memory_space<vmem>>) attributes {dimension_semantics = [#tpu.dimension_semantics<parallel>], iteration_bounds = array<i64: 2>, scalar_prefetch = 0 : i64, scratch_operands = 0 : i64, tpu.core_type = #tpu.core_type<tc>, window_params = [{transform_indices = @transform_0, window_bounds = array<i64: 36, 256>}, {pipeline_mode = #tpu.pipeline_mode<synchronous>, transform_indices = @transform_1, window_bounds = array<i64: 8, 36>}, {pipeline_mode = #tpu.pipeline_mode<synchronous>, transform_indices = @transform_2, window_bounds = array<i64: 8, 1>}, {transform_indices = @transform_3, window_bounds = array<i64: 8, 256>}]} {
    %c0 = arith.constant 0 : index
    %c0_0 = arith.constant 0 : index
    %0 = vector.load %arg2[%c0, %c0_0] : memref<8x36xf32, #tpu.memory_space<vmem>>, vector<8x36xf32>
    %c0_1 = arith.constant 0 : index
    %c0_2 = arith.constant 0 : index
    %1 = vector.load %arg1[%c0_1, %c0_2] : memref<36x256xf32, #tpu.memory_space<vmem>>, vector<36x256xf32>
    %cst = arith.constant dense<0.000000e+00> : vector<8x256xf32>
    %2 = tpu.matmul %0, %1, %cst {dimension_numbers = #tpu.dot_dimension_numbers<[1], [0], [0], [1], [0, 0, 1, 1], [], []>} : vector<8x36xf32>, vector<36x256xf32>, vector<8x256xf32> -> vector<8x256xf32>
    %c0_3 = arith.constant 0 : index
    %c0_4 = arith.constant 0 : index
    %3 = vector.load %arg3[%c0_3, %c0_4] : memref<8x1xf32, #tpu.memory_space<vmem>>, vector<8x1xf32>
    %4 = vector.broadcast %3 : vector<8x1xf32> to vector<8x256xf32>
    %5 = arith.addf %2, %4 : vector<8x256xf32>
    %c0_5 = arith.constant 0 : index
    %c0_6 = arith.constant 0 : index
    %6 = vector.load %arg4[%c0_5, %c0_6] : memref<8x256xf32, #tpu.memory_space<vmem>>, vector<8x256xf32>
    tpu.vector_store %arg4[%c0_5, %c0_6], %5 {strides = array<i32>} : memref<8x256xf32, #tpu.memory_space<vmem>>, vector<8x256xf32>,
    return
  }
  func.func @transform_0(%arg0: i32) -> (i32, i32) {
    %c0_i32 = arith.constant 0 : i32
    %c0_i32_0 = arith.constant 0 : i32
    return %c0_i32, %arg0 : i32, i32
  }
  func.func @transform_1(%arg0: i32) -> (i32, i32) {
    %c0_i32 = arith.constant 0 : i32
    %c0_i32_0 = arith.constant 0 : i32
    %c0_i32_1 = arith.constant 0 : i32
    return %c0_i32, %c0_i32_0 : i32, i32
  }
  func.func @transform_2(%arg0: i32) -> (i32, i32) {
    %c0_i32 = arith.constant 0 : i32
    %c0_i32_0 = arith.constant 0 : i32
    %c0_i32_1 = arith.constant 0 : i32
    return %c0_i32, %c0_i32_0 : i32, i32
  }
  func.func @transform_3(%arg0: i32) -> (i32, i32) {
    %c0_i32 = arith.constant 0 : i32
    %c0_i32_0 = arith.constant 0 : i32
    return %c0_i32, %arg0 : i32, i32
  }
}

</mosaic_0001>

<llo_original>
// kernel: tpu_custom_call.1
$region0: #{tpu_custom_call.1}
  #allocation0 [shape = 'u32[]', space=smem, size = 0x4, offset = 0x4, fixed_abs, tag = 'smem constant byte address 0x4 - core index']
  #allocation1 [shape = 'u32[144,128]{1,0:T(1,128)}', space=vmem, size = 0x12000, scoped, tag = 'internal scratch']
  %s0 = inlined_call_operand.hbm [shape: f32[36,512], index: 0, kind: input, shape index: {}]
  %s1 = inlined_call_operand.vmem [shape: f32[8,36], index: 1, kind: input, shape index: {}]
  %s2 = inlined_call_operand.vmem [shape: f32[8,1], index: 2, kind: input, shape index: {}]
  %s3 = inlined_call_operand.hbm [shape: f32[8,512], index: 3, kind: output, shape index: {}]
  %s4 = sld [smem:[#allocation0]]
  $region49: #{tpu_custom_call.1} parent=0
    _
  %s6 = ssub.s32 1, %s4
  %s7 = scalar_select 0, %s6, %s4
  $region1: #{tpu_custom_call.1} parent=0
    #allocation2 [shape = 'u8[81920]{0}', space=vmem, size = 0x14000, scoped, tag = 'input window, operand 0']
    #allocation3 [shape = 's32[2]{0}', space=sflag, size = 0x8, scoped, tag = 'scoped memory for tpu_custom_call.1']
    #allocation4 [shape = 's32[2]{0}', space=sflag, size = 0x8, scoped, tag = 'scoped memory for tpu_custom_call.1']
    #allocation5 [shape = 'u8[16384]{0}', space=vmem, size = 0x4000, scoped, tag = 'output window, operand 0']
    %8 = vsyncpa [#allocation3], 0
    %s9 = scalar_lea.sflag [#allocation3], 1
    %10 = vsyncpa %s9, 0
    %11 = vsyncpa [#allocation4], 0
    %s12 = scalar_lea.sflag [#allocation4], 1
    %13 = vsyncpa %s12, 0
    loop: start=0, step=1, limit=4
    $region2: #{tpu_custom_call.1} parent=1 // loop_pre_header
      _
    $region3: #{tpu_custom_call.1} parent=1 // loop_header
      %s15 = sphi 0, %s19
      %p16 = scmp.ge.s32.totalorder %s15, 4
      %s25 = sphi 0, %s27
      %s28 = sphi 0, %s25
      %s29 = sphi 0, %s28
      %s45 = sphi 0, %s29
      %s49 = sphi 0, %s49
      %s51 = sphi 0, %s49
      %s52 = sphi 0, %s51
      %s66 = sphi 0, %s52
      %s70 = sphi 0, %s70
      %s72 = sphi 0, %s70
      %s73 = sphi 0, %s72
      %s87 = sphi 0, %s73
      %s93 = sphi 0, %s95
      %s96 = sphi 0, %s93
      %s97 = sphi 0, %s96
      %s113 = sphi 0, %s97
    $region4: #{tpu_custom_call.1} parent=1 // loop_header_branch
      %18 = sbr.rel (%p16) target = $region8
    $region5: #{tpu_custom_call.1} parent=1 // loop_body
      %s20 = ssub.s32 %s15, 1
      %s21 = ssub.s32 %s15, 2
      %s22 = sadd.s32 %s15, 1
      %s23 = ssub.s32 %s15, %s22
      %p24 = scmp.eq.s32.totalorder %s23, 0
      %s26 = sadd.s32 %s25, 1
      %s27 = scalar_select %p24, %s25, %s26
      %p30 = pneg %p24
      %p31 = scmp.eq.s32.totalorder %s15, 1
      %p32 = por %p30, %p31
      %p33 = scmp.ne.s32.totalorder %s25, %s28
      %p34 = scmp.eq.s32.totalorder %s15, 0
      %p35 = por %p33, %p34
      %p36 = scmp.ne.s32.totalorder %s25, %s28
      %p37 = scmp.eq.s32.totalorder %s20, 1
      %p38 = por %p36, %p37
      %p39 = scmp.ne.s32.totalorder %s28, %s29
      %p40 = scmp.eq.s32.totalorder %s20, 0
      %p41 = por %p39, %p40
      %p42 = scmp.ne.s32.totalorder %s28, %s29
      %p43 = scmp.eq.s32.totalorder %s21, 1
      %p44 = por %p42, %p43
      %p46 = scmp.ne.s32.totalorder %s29, %s45
      %p47 = scmp.eq.s32.totalorder %s21, 0
      %p48 = por %p46, %p47
      %s50 = sadd.s32 %s49, 1
      %p53 = scmp.eq.s32.totalorder %s15, 1
      %p54 = scmp.ne.s32.totalorder %s49, %s51
      %p55 = scmp.eq.s32.totalorder %s15, 0
      %p56 = por %p54, %p55
      %p57 = scmp.ne.s32.totalorder %s49, %s51
      %p58 = scmp.eq.s32.totalorder %s20, 1
      %p59 = por %p57, %p58
      %p60 = scmp.ne.s32.totalorder %s51, %s52
      %p61 = scmp.eq.s32.totalorder %s20, 0
      %p62 = por %p60, %p61
      %p63 = scmp.ne.s32.totalorder %s51, %s52
      %p64 = scmp.eq.s32.totalorder %s21, 1
      %p65 = por %p63, %p64
      %p67 = scmp.ne.s32.totalorder %s52, %s66
      %p68 = scmp.eq.s32.totalorder %s21, 0
      %p69 = por %p67, %p68
      %s71 = sadd.s32 %s70, 1
      %p74 = scmp.eq.s32.totalorder %s15, 1
      %p75 = scmp.ne.s32.totalorder %s70, %s72
      %p76 = scmp.eq.s32.totalorder %s15, 0
      %p77 = por %p75, %p76
      %p78 = scmp.ne.s32.totalorder %s70, %s72
      %p79 = scmp.eq.s32.totalorder %s20, 1
      %p80 = por %p78, %p79
      %p81 = scmp.ne.s32.totalorder %s72, %s73
      %p82 = scmp.eq.s32.totalorder %s20, 0
      %p83 = por %p81, %p82
      %p84 = scmp.ne.s32.totalorder %s72, %s73
      %p85 = scmp.eq.s32.totalorder %s21, 1
      %p86 = por %p84, %p85
      %p88 = scmp.ne.s32.totalorder %s73, %s87
      %p89 = scmp.eq.s32.totalorder %s21, 0
      %p90 = por %p88, %p89
      %s91 = ssub.s32 %s15, %s22
      %p92 = scmp.eq.s32.totalorder %s91, 0
      %s94 = sadd.s32 %s93, 1
      %s95 = scalar_select %p92, %s93, %s94
      %p98 = pneg %p92
      %p99 = scmp.eq.s32.totalorder %s15, 1
      %p100 = por %p98, %p99
      %p101 = scmp.ne.s32.totalorder %s93, %s96
      %p102 = scmp.eq.s32.totalorder %s15, 0
      %p103 = por %p101, %p102
      %p104 = scmp.ne.s32.totalorder %s93, %s96
      %p105 = scmp.eq.s32.totalorder %s20, 1
      %p106 = por %p104, %p105
      %p107 = scmp.ne.s32.totalorder %s96, %s97
      %p108 = scmp.eq.s32.totalorder %s20, 0
      %p109 = por %p107, %p108
      %p110 = scmp.ne.s32.totalorder %s96, %s97
      %p111 = scmp.eq.s32.totalorder %s21, 1
      %p112 = por %p110, %p111
      %p114 = scmp.ne.s32.totalorder %s97, %s113
      %p115 = scmp.eq.s32.totalorder %s21, 0
      %p116 = por %p114, %p115
      %p117 = scmp.le.s32.totalorder 1, %s15
      %p118 = scmp.lt.s32.totalorder %s15, 3
      %p119 = pnand %p117, %p118
      %p120 = pneg %p119
      // Predicated region
      $region9: #{tpu_custom_call.1} parent=5 // pred_check
        _
      $region10: #{tpu_custom_call.1} parent=5 // pred_check_branch
        %122 = sbr.rel (%p119) target = $region12
      $region11: #{tpu_custom_call.1} parent=5 // pred_region
        %s123 = ssub.s32 %s15, 1
        // Predicated region
        $region13: #{tpu_custom_call.1} parent=11 // pred_check
          %p124 = pneg %p62
        $region14: #{tpu_custom_call.1} parent=11 // pred_check_branch
          %126 = sbr.rel (%p124) target = $region16
        $region15: #{tpu_custom_call.1} parent=11 // pred_region
          _
        $region16: #{tpu_custom_call.1} parent=11 // pred_fallthru
          _
        // Predicated region
        $region17: #{tpu_custom_call.1} parent=11 // pred_check
          %p127 = pneg %p83
        $region18: #{tpu_custom_call.1} parent=11 // pred_check_branch
          %129 = sbr.rel (%p127) target = $region20
        $region19: #{tpu_custom_call.1} parent=11 // pred_region
          _
        $region20: #{tpu_custom_call.1} parent=11 // pred_fallthru
          _
      $region12: #{tpu_custom_call.1} parent=5 // pred_fallthru
        _
      %p130 = scmp.lt.s32.totalorder %s15, 2
      // Predicated region
      $region21: #{tpu_custom_call.1} parent=5 // pred_check
        %p131 = pneg %p130
      $region22: #{tpu_custom_call.1} parent=5 // pred_check_branch
        %133 = sbr.rel (%p131) target = $region24
      $region23: #{tpu_custom_call.1} parent=5 // pred_region
        // Predicated region
        $region25: #{tpu_custom_call.1} parent=23 // pred_check
          %p134 = pneg %p35
        $region26: #{tpu_custom_call.1} parent=23 // pred_check_branch
          %136 = sbr.rel (%p134) target = $region28
        $region27: #{tpu_custom_call.1} parent=23 // pred_region
          %s137 = sand.u32 %s25, 1
          %s138 = scalar_lea.sflag [#allocation3], %s137
          %s139 = sand.u32 %s25, 1
          %s140 = smul.addr %s139, 80
          %s141 = scalar_lea.vmem [#allocation2], %s140
          %s142 = smul.u32 2, %s15
          %s144 = ssub.s32 1280, 1280
          %145 = vsyncadd %s138, %s144
          %s146 = smul.addr %s142, 128
          %s147 = scalar_lea.hbm %s0, %s146
          %s148 = sshll.u32 %s141, 4
          %s149 = int_to_ptr.vmem [resolvable:$true] %s148
          %154 = dma.hbm_to_vmem [thread:$0]  %s147, 1280, %s149, %s138, 512, 256, 16
        $region28: #{tpu_custom_call.1} parent=23 // pred_fallthru
          _
      $region24: #{tpu_custom_call.1} parent=5 // pred_fallthru
        _
      %p155 = scmp.le.s32.totalorder 1, %s15
      %p156 = scmp.lt.s32.totalorder %s15, 3
      %p157 = pnand %p155, %p156
      %p158 = pneg %p157
      // Predicated region
      $region29: #{tpu_custom_call.1} parent=5 // pred_check
        _
      $region30: #{tpu_custom_call.1} parent=5 // pred_check_branch
        %160 = sbr.rel (%p157) target = $region32
      $region31: #{tpu_custom_call.1} parent=5 // pred_region
        %s161 = ssub.s32 %s15, 1
        %s162 = sand.u32 %s28, 1
        %s163 = scalar_lea.sflag [#allocation3], %s162
        %s164 = sand.u32 %s28, 1
        %s165 = smul.addr %s164, 80
        %s166 = scalar_lea.vmem [#allocation2], %s165
        // Predicated region
        $region33: #{tpu_custom_call.1} parent=31 // pred_check
          %p167 = pneg %p41
        $region34: #{tpu_custom_call.1} parent=31 // pred_check_branch
          %169 = sbr.rel (%p167) target = $region36
        $region35: #{tpu_custom_call.1} parent=31 // pred_region
          %170 = dma.done %s163, 1280
        $region36: #{tpu_custom_call.1} parent=31 // pred_fallthru
          _
        %s171 = sand.u32 %s28, 1
        %s172 = scalar_lea.sflag [#allocation3], %s171
        %s173 = sand.u32 %s28, 1
        %s174 = smul.addr %s173, 80
        %s175 = scalar_lea.vmem [#allocation2], %s174
        %p176 = pneg %p41
        %p177 = pneg %p38
        %p178 = pneg %p62
        %p179 = pneg %p59
        %p180 = pneg %p83
        %p181 = pneg %p80
        %p182 = pneg %p109
        %p183 = pneg %p106
        %s184 = sand.u32 %s96, 1
        %s185 = scalar_lea.sflag [#allocation4], %s184
        %s186 = sand.u32 %s96, 1
        %s187 = smul.addr %s186, 16
        %s188 = scalar_lea.vmem [#allocation5], %s187
        %s189 = smul.u32 2, %s20
        %s190 = smul.u32 2, %s20
        %v191 = vld [vmem:[%s1] sm:$0xff]
        %v192 = vld [vmem:[%s166] sm:$0xff]
        %v193 = vld [vmem:[%s166 + $0x8] sm:$0xff]
        %v194 = vld [vmem:[%s166 + $0x10] sm:$0xff]
        %v195 = vld [vmem:[%s166 + $0x18] sm:$0xff]
        %v196 = vld [vmem:[%s166 + $0x20] sm:$0xff]
        %v197 = vld [vmem:[%s166 + $0x28] sm:$0xff]
        %v198 = vld [vmem:[%s166 + $0x30] sm:$0xff]
        %v199 = vld [vmem:[%s166 + $0x38] sm:$0xff]
        %v200 = vld [vmem:[%s166 + $0x40] sm:$0xf]
        %v201 = vld [vmem:[%s166 + $0x48] sm:$0xf]
        %v202 = vld [vmem:[%s2] sm:$0xff]
        %204 = vset.pattern.permute.xlu0 0
        %205 = vperm.xlu0 %204, %v202
        %v206 = vpop.permute.xlu0 %205
        %vm208 = vcmask 293888
        %v210 = vsel %vm208, %v191, 0
        %vm212 = vcmask 1043456
        %v214 = vsel %vm212, %v200, 0
        %v217 = vsel %vm212, %v201, 0
        %219 = vmatprep.subr.mxu0 0.0
        %220 = vmatpush1.msra.mxu0 0.0
        %221 = vmatprep.subr.mxu0 0.0
        %222 = vmatpush1.msra.mxu0 0.0
        %223 = vmatprep.subr.mxu0 0.0
        %224 = vmatpush1.msra.mxu0 0.0
        %225 = vmatprep.subr.mxu0 0.0
        %226 = vmatpush1.msra.mxu0 0.0
        %227 = vmatprep.subr.mxu0 0.0
        %228 = vmatpush1.msra.mxu0 0.0
        %229 = vmatprep.subr.mxu0 0.0
        %230 = vmatpush1.msra.mxu0 0.0
        %231 = vmatprep.subr.mxu0 0.0
        %232 = vmatpush1.msra.mxu0 0.0
        %233 = vmatprep.subr.mxu0 0.0
        %234 = vmatpush1.msra.mxu0 0.0
        %235 = vmatprep.subr.mxu0 0.0
        %236 = vmatpush1.msra.mxu0 0.0
        %237 = vmatprep.subr.mxu0 0.0
        %238 = vmatpush1.msra.mxu0 0.0
        %239 = vmatprep.subr.mxu0 0.0
        %240 = vmatpush1.msra.mxu0 0.0
        %241 = vmatprep.subr.mxu0 %v217
        %242 = vmatpush1.msra.mxu0 %v214
        %243 = vmatprep.subr.mxu0 %v199
        %244 = vmatpush1.msra.mxu0 %v198
        %245 = vmatprep.subr.mxu0 %v197
        %246 = vmatpush1.msra.mxu0 %v196
        %247 = vmatprep.subr.mxu0 %v195
        %248 = vmatpush1.msra.mxu0 %v194
        %249 = vmatprep.subr.mxu0 %v193
        %250 = vmatpush1.msra.mxu0 %v192
        %251 = vmatprep.subr.mxu0 0.0
        %252 = vmatpush2.msra.mxu0 0.0
        %253 = vmatprep.subr.mxu0 0.0
        %254 = vmatpush2.msra.mxu0 0.0
        %255 = vmatprep.subr.mxu0 0.0
        %256 = vmatpush2.msra.mxu0 0.0
        %257 = vmatprep.subr.mxu0 0.0
        %258 = vmatpush2.msra.mxu0 0.0
        %259 = vmatprep.subr.mxu0 0.0
        %260 = vmatpush2.msra.mxu0 0.0
        %261 = vmatprep.subr.mxu0 0.0
        %262 = vmatpush2.msra.mxu0 0.0
        %263 = vmatprep.subr.mxu0 0.0
        %264 = vmatpush2.msra.mxu0 0.0
        %265 = vmatprep.subr.mxu0 0.0
        %266 = vmatpush2.msra.mxu0 0.0
        %267 = vmatprep.subr.mxu0 0.0
        %268 = vmatpush2.msra.mxu0 0.0
        %269 = vmatprep.subr.mxu0 0.0
        %270 = vmatpush2.msra.mxu0 0.0
        %271 = vmatprep.subr.mxu0 0.0
        %272 = vmatpush2.msra.mxu0 0.0
        %273 = vmatprep.subr.mxu0 0.0
        %274 = vmatpush2.msra.mxu0 0.0
        %275 = vmatprep.subr.mxu0 0.0
        %276 = vmatpush2.msra.mxu0 0.0
        %277 = vmatprep.subr.mxu0 0.0
        %278 = vmatpush2.msra.mxu0 0.0
        %279 = vmatprep.subr.mxu0 0.0
        %280 = vmatpush2.msra.mxu0 0.0
        %281 = vmatprep.subr.mxu0 0.0
        %282 = vmatpush2.msra.mxu0 0.0
        %283 = vmatprep.mubr.f32.mxu0 0.0
        %284 = vmatmul.mubr.f32.gmra.mxu0 %v210
        %v285 = vpop.f32.mrf.mxu0
        %v286 = vadd.f32 %v206, %v285
        %v287 = vpop.f32.mrf.mxu0
        %v288 = vadd.f32 %v206, %v287
        %289 = vdwg.mxu0
        %290 = vst [vmem:[%s188] sm:$0xff] %v286
        %291 = vst [vmem:[%s188 + $0x8] sm:$0xff] %v288
        %s292 = sand.u32 %s96, 1
        %s293 = scalar_lea.sflag [#allocation4], %s292
        %s294 = sand.u32 %s96, 1
        %s295 = smul.addr %s294, 16
        %s296 = scalar_lea.vmem [#allocation5], %s295
        // Predicated region
        $region37: #{tpu_custom_call.1} parent=31 // pred_check
          %p297 = pneg %p106
        $region38: #{tpu_custom_call.1} parent=31 // pred_check_branch
          %299 = sbr.rel (%p297) target = $region40
        $region39: #{tpu_custom_call.1} parent=31 // pred_region
          %s300 = smul.u32 2, %s20
          %s302 = ssub.s32 256, 256
          %303 = vsyncadd %s293, %s302
          %s304 = smul.addr %s300, 128
          %s305 = scalar_lea.hbm %s3, %s304
          %s307 = sshll.u32 %s296, 4
          %s308 = int_to_ptr.vmem [resolvable:$true] %s307
          %310 = dma.vmem_to_hbm [thread:$0]  %s308, 256, %s305, %s293
        $region40: #{tpu_custom_call.1} parent=31 // pred_fallthru
          _
      $region32: #{tpu_custom_call.1} parent=5 // pred_fallthru
        _
      %p311 = scmp.le.s32.totalorder 2, %s15
      // Predicated region
      $region41: #{tpu_custom_call.1} parent=5 // pred_check
        %p312 = pneg %p311
      $region42: #{tpu_custom_call.1} parent=5 // pred_check_branch
        %314 = sbr.rel (%p312) target = $region44
      $region43: #{tpu_custom_call.1} parent=5 // pred_region
        %s315 = ssub.s32 %s15, 2
        // Predicated region
        $region45: #{tpu_custom_call.1} parent=43 // pred_check
          %p316 = pneg %p112
        $region46: #{tpu_custom_call.1} parent=43 // pred_check_branch
          %318 = sbr.rel (%p316) target = $region48
        $region47: #{tpu_custom_call.1} parent=43 // pred_region
          %s319 = sand.u32 %s97, 1
          %s320 = scalar_lea.sflag [#allocation4], %s319
          %s321 = sand.u32 %s97, 1
          %s322 = smul.addr %s321, 16
          %s323 = scalar_lea.vmem [#allocation5], %s322
          %324 = dma.done %s320, 256
        $region48: #{tpu_custom_call.1} parent=43 // pred_fallthru
          _
      $region44: #{tpu_custom_call.1} parent=5 // pred_fallthru
        _
    $region6: #{tpu_custom_call.1} parent=1 // loop_footer
      %s19 = sadd.s32 1, %s15
    $region7: #{tpu_custom_call.1} parent=1 // loop_footer_branch
      %14 = sbr.rel target = $region3
    $region8: #{tpu_custom_call.1} parent=1 // loop_exit
      _
    %325 = vsyncpa [#allocation3], 1
    %s326 = scalar_lea.sflag [#allocation3], 1
    %327 = vsyncpa %s326, 1
    %328 = vsyncpa [#allocation4], 1
    %s329 = scalar_lea.sflag [#allocation4], 1
    %330 = vsyncpa %s329, 1

</llo_original>
